<compile_context>
chip_gen: v6e
topology: v6e:2x2x1
jax: 0.10.0
libtpu: 0.0.40
codegen_flags: <defaults>
</compile_context>

<pallas_src>
import dataclasses
import functools

import numpy as np
import jax
import jax.numpy as jnp
from jax.experimental import pallas as pl
from jax.experimental.pallas import tpu as pltpu


PRELU_ALPHA = 0.25  # nn.PReLU() default init; kept static (not a traced param).


def _round_up(x, m):
    return (x + m - 1) // m * m


# ----------------------------------------------------------------------------
# Per-chip tiling defaults
# ----------------------------------------------------------------------------
def _chip_tuning():
    """(TM cap, scoped-VMEM limit bytes, per-block VMEM budget bytes)."""
    try:
        kind = jax.devices()[0].device_kind.lower()
    except Exception:  # pragma: no cover - backend probing only
        kind = ""
    if "v7" in kind or "7x" in kind:
        # Dual TensorCore, 64 MiB VMEM per TC: 2 parallel M steps at M=512,
        # keep double-buffered block footprint well under the per-TC VMEM.
        return 256, 48 * 1024 * 1024, 16 * 1024 * 1024
    # v5e / v6e: single TensorCore, 128 MiB VMEM: one big block per conv.
    return 512, 64 * 1024 * 1024, 24 * 1024 * 1024


_TM_CAP, _VMEM_LIMIT_BYTES, _BLOCK_VMEM_BUDGET = _chip_tuning()


def _choose_tk(tm, k, n_p, tk_cap):
    """Full-K whenever the double-buffered block footprint fits the budget."""
    def footprint(tk):
        # 2x double-buffered bf16 A/B blocks + f32 accumulator/output block.
        return 2 * (tm * tk + tk * n_p) * 2 + tm * n_p * 4

    if tk_cap is None:
        if footprint(k) <= _BLOCK_VMEM_BUDGET:
            return k                        # single reduction step (common case)
        tk_cap = 512
    start = min(tk_cap, k) // 128 * 128
    for tk in range(start, 0, -128):        # largest 128-multiple divisor of K
        if k % tk == 0:
            return tk
    return k


# ----------------------------------------------------------------------------
# Pallas fused matmul kernels (the conv hot path)
# ----------------------------------------------------------------------------
def _apply_act(y, act, alpha):
    if act == "relu":
        return jnp.maximum(y, 0.0)
    if act == "sigmoid":
        return jax.nn.sigmoid(y)
    if act == "prelu":
        return jnp.where(y >= 0.0, y, alpha * y)
    return y


def _mm_kernel_single(a_ref, b_ref, s_ref, t_ref, o_ref, *, act, alpha):
    """Single reduction step: dot straight into the epilogue, no scratch."""
    y = jnp.dot(a_ref[...], b_ref[...], preferred_element_type=jnp.float32)
    o_ref[...] = _apply_act(y * s_ref[...] + t_ref[...], act, alpha).astype(o_ref.dtype)


def _mm_kernel_multi(a_ref, b_ref, s_ref, t_ref, o_ref, acc_ref, *, act, alpha):
    """K-tiled reduction (innermost grid axis, 'arbitrary') with f32 scratch."""
    k = pl.program_id(1)

    @pl.when(k == 0)
    def _():
        acc_ref[...] = jnp.zeros_like(acc_ref)

    acc_ref[...] += jnp.dot(a_ref[...], b_ref[...],
                            preferred_element_type=jnp.float32)

    @pl.when(k == pl.num_programs(1) - 1)
    def _():
        o_ref[...] = _apply_act(acc_ref[...] * s_ref[...] + t_ref[...],
                                act, alpha).astype(o_ref.dtype)


@functools.partial(jax.jit, static_argnames=("act", "alpha", "out_dtype", "tk_cap"))
def pallas_matmul(a, b, scale, shift, *, act="none", alpha=PRELU_ALPHA,
                  out_dtype=jnp.bfloat16, tk_cap=None):
    """out = act((a @ b) * scale + shift), written in out_dtype.

    a: (M, K) float; b: (K, Np) bf16 with Np a multiple of 128 (lane dense);
    scale/shift: (1, Np) float32.  Returns (M, Np) out_dtype.
    """
    M, K = a.shape
    Np = b.shape[1]

    Mp = _round_up(M, 8)
    TM = min(Mp, _TM_CAP)                     # 512 on v5e/v6e, 256 on v7x
    Mp = _round_up(Mp, TM)
    a = a.astype(jnp.bfloat16)                # bf16 operands, f32 accumulate
    if Mp != M:
        a = jnp.pad(a, ((0, Mp - M), (0, 0)))

    TK = _choose_tk(TM, K, Np, tk_cap)
    nk = K // TK

    if nk == 1:
        kernel = functools.partial(_mm_kernel_single, act=act, alpha=alpha)
        grid = (Mp // TM,)
        in_specs = [pl.BlockSpec((TM, K), lambda i: (i, 0)),
                    pl.BlockSpec((K, Np), lambda i: (0, 0)),
                    pl.BlockSpec((1, Np), lambda i: (0, 0)),
                    pl.BlockSpec((1, Np), lambda i: (0, 0))]
        out_spec = pl.BlockSpec((TM, Np), lambda i: (i, 0))
        scratch = []
        dims = ("parallel",)
    else:
        kernel = functools.partial(_mm_kernel_multi, act=act, alpha=alpha)
        grid = (Mp // TM, nk)
        in_specs = [pl.BlockSpec((TM, TK), lambda i, k: (i, k)),
                    pl.BlockSpec((TK, Np), lambda i, k: (k, 0)),
                    pl.BlockSpec((1, Np), lambda i, k: (0, 0)),
                    pl.BlockSpec((1, Np), lambda i, k: (0, 0))]
        out_spec = pl.BlockSpec((TM, Np), lambda i, k: (i, 0))
        scratch = [pltpu.VMEM((TM, Np), jnp.float32)]
        dims = ("parallel", "arbitrary")      # reduction axis innermost

    out = pl.pallas_call(
        kernel,
        out_shape=jax.ShapeDtypeStruct((Mp, Np), out_dtype),
        grid_spec=pltpu.PrefetchScalarGridSpec(
            num_scalar_prefetch=0,
            grid=grid,
            in_specs=in_specs,
            out_specs=out_spec,
            scratch_shapes=scratch),
        compiler_params=pltpu.CompilerParams(
            dimension_semantics=dims,
            vmem_limit_bytes=_VMEM_LIMIT_BYTES),
    )(a, b, scale, shift)
    return out[:M]


# ----------------------------------------------------------------------------
# Conv wrapper (NHWC, stride 1) + bilinear resize helpers
# ----------------------------------------------------------------------------
@jax.tree_util.register_static
@dataclasses.dataclass(frozen=True)
class ConvMeta:
    cout: int
    kh: int
    kw: int
    pad: int
    dil: int


def _extract_patches(x, kh, kw, pad, dil):
    """NHWC im2col for stride-1 convs; feature ordering (kh, kw, C), C minor."""
    if kh == 1 and kw == 1 and pad == 0:
        return x
    B, H, W, C = x.shape
    if pad:
        x = jnp.pad(x, ((0, 0), (pad, pad), (pad, pad), (0, 0)))
    Ho = H + 2 * pad - dil * (kh - 1)
    Wo = W + 2 * pad - dil * (kw - 1)
    cols = []
    for i in range(kh):
        for j in range(kw):
            cols.append(x[:, i * dil:i * dil + Ho, j * dil:j * dil + Wo, :])
    return jnp.concatenate(cols, axis=-1)


def _conv_xla(x, layer, act, alpha, out_dtype):
    """XLA path for degenerate convs (lane-sparse K or 1-channel heads)."""
    m = layer["meta"]
    patches = _extract_patches(x, m.kh, m.kw, m.pad, m.dil)
    w = layer["wm"][:, :m.cout].astype(patches.dtype)
    y = jnp.einsum("bhwk,kc->bhwc", patches, w,
                   preferred_element_type=jnp.float32)
    y = y * layer["scale"][0, :m.cout] + layer["shift"][0, :m.cout]
    return _apply_act(y, act, alpha).astype(out_dtype)


def conv2d(x, layer, act="none", alpha=PRELU_ALPHA, out_dtype=jnp.bfloat16):
    """nn.Conv2d (stride 1) + folded BN/bias + activation, NHWC in / NHWC out."""
    m = layer["meta"]
    K = layer["wm"].shape[0]
    if K < 128:
        # Backbone 1x1 (K=3), CBAM 7x7 (K=98, cout=1), GGA/gate/pred 1x1s:
        # pallas_call launch + pad/slice costs more than the compute here.
        return _conv_xla(x, layer, act, alpha, out_dtype)
    x = x.astype(jnp.bfloat16)                 # bf16 im2col (9x input for 3x3)
    patches = _extract_patches(x, m.kh, m.kw, m.pad, m.dil)
    B, Ho, Wo, Kp = patches.shape
    out = pallas_matmul(patches.reshape(B * Ho * Wo, Kp), layer["wm"],
                        layer["scale"], layer["shift"],
                        act=act, alpha=alpha, out_dtype=out_dtype)
    return out[:, :m.cout].reshape(B, Ho, Wo, m.cout)


@functools.lru_cache(maxsize=None)
def _interp_matrix(out_size, in_size, align_corners):
    o = np.arange(out_size, dtype=np.float64)
    if align_corners:
        src = o * ((in_size - 1) / (out_size - 1)) if out_size > 1 else np.zeros_like(o)
    else:
        src = np.maximum((o + 0.5) * (in_size / out_size) - 0.5, 0.0)
    i0 = np.clip(np.floor(src).astype(np.int64), 0, in_size - 1)
    i1 = np.minimum(i0 + 1, in_size - 1)
    frac = src - i0
    m = np.zeros((out_size, in_size), dtype=np.float32)
    m[np.arange(out_size), i0] += 1.0 - frac
    m[np.arange(out_size), i1] += frac
    return jnp.asarray(m)


def bilinear_resize(x, out_h, out_w, align_corners):
    """F.interpolate(mode='bilinear') on NHWC via separable interp matrices."""
    # TODO(synk): these tiny separable resizes are left to XLA (two einsums) --
    # routing them through Pallas costs more in launch/layout than the math.
    _, H, W, _ = x.shape
    Mh = _interp_matrix(out_h, H, align_corners)
    Mw = _interp_matrix(out_w, W, align_corners)
    y = jnp.einsum("oh,bhwc->bowc", Mh, x)
    y = jnp.einsum("pw,bowc->bopc", Mw, y)
    return y.astype(x.dtype)


def up2(x):
    return bilinear_resize(x, x.shape[1] * 2, x.shape[2] * 2, align_corners=True)


# ----------------------------------------------------------------------------
# Deterministic parameter init (BN pre-folded, weights pre-packed to (K, Np))
# ----------------------------------------------------------------------------
class Rng:
    def __init__(self, seed):
        self._key = jax.random.PRNGKey(seed)

    def next(self):
        self._key, sub = jax.random.split(self._key)
        return sub


def _prep_conv(w_hwio, scale=None, shift=None, pad=0, dil=1):
    """Pre-pack a conv: lane-dense (K, Np) bf16 weights + folded f32 epilogue."""
    kh, kw, ci, co = w_hwio.shape
    K = kh * kw * ci
    Np = _round_up(co, 128)
    wm = jnp.zeros((K, Np), jnp.float32).at[:, :co].set(w_hwio.reshape(K, co))
    if scale is None:
        scale = jnp.ones((co,), jnp.float32)
        shift = jnp.zeros((co,), jnp.float32)
    return {"wm": wm.astype(jnp.bfloat16),
            "meta": ConvMeta(co, kh, kw, pad, dil),
            "scale": jnp.zeros((1, Np), jnp.float32).at[0, :co].set(scale),
            "shift": jnp.zeros((1, Np), jnp.float32).at[0, :co].set(shift)}


def init_w_hwio(rng, kh, kw, cin, cout):
    fan = cin * kh * kw
    return (jax.random.normal(rng.next(), (kh, kw, cin, cout), jnp.float32)
            / np.sqrt(fan))


def init_b(rng, c):
    return 0.01 * jax.random.normal(rng.next(), (c,), jnp.float32)


def init_bn(rng, c, eps=1e-5):
    gamma = 1.0 + 0.1 * jax.random.normal(rng.next(), (c,), jnp.float32)
    beta = 0.05 * jax.random.normal(rng.next(), (c,), jnp.float32)
    mean = 0.05 * jax.random.normal(rng.next(), (c,), jnp.float32)
    var = 1.0 + 0.1 * jnp.abs(jax.random.normal(rng.next(), (c,), jnp.float32))
    s = gamma * jax.lax.rsqrt(var + eps)
    return s, beta - mean * s                        # folded (scale, shift)


def conv_bn(rng, cin, cout, k, pad=0, dil=1):
    s, t = init_bn(rng, cout)
    return _prep_conv(init_w_hwio(rng, k, k, cin, cout), s, t, pad=pad, dil=dil)


def conv_bias(rng, cin, cout, k, pad=0):
    return _prep_conv(init_w_hwio(rng, k, k, cin, cout),
                      jnp.ones((cout,), jnp.float32), init_b(rng, cout), pad=pad)


def conv_plain(rng, cin, cout, k, pad=0, dil=1):
    return _prep_conv(init_w_hwio(rng, k, k, cin, cout), pad=pad, dil=dil)


def init_aspp(rng, cin, cout=32):
    p = {"b0": conv_bn(rng, cin, cout, 1)}
    for i, r in enumerate((6, 12, 18)):
        p[f"br{i}"] = conv_bn(rng, cin, cout, 3, pad=r, dil=r)
    p["pool_w"] = init_w_hwio(rng, 1, 1, cin, cout).reshape(cin, cout)
    p["pool_s"], p["pool_t"] = init_bn(rng, cout)
    p["proj"] = conv_bn(rng, 5 * cout, cout, 1)
    return p


def init_cbam(rng, c, ratio=16):
    r = max(c // ratio, 1)
    return {"fc1": init_w_hwio(rng, 1, 1, c, r).reshape(c, r),
            "fc2": init_w_hwio(rng, 1, 1, r, c).reshape(r, c),
            "sa": conv_plain(rng, 2, 1, 7, pad=3)}


def init_gga(rng, c):
    cin = c + 1
    s0, t0 = init_bn(rng, cin)                        # BatchNorm2d(c+1) on input
    w1 = init_w_hwio(rng, 1, 1, cin, cin).reshape(cin, cin)
    b1 = init_b(rng, cin)
    w1_f = (w1 * s0[:, None]).reshape(1, 1, cin, cin)  # fold input-BN into conv1
    b1_f = t0 @ w1 + b1
    conv1 = _prep_conv(w1_f, jnp.ones((cin,), jnp.float32), b1_f)
    w2 = init_w_hwio(rng, 1, 1, cin, 1)
    b2 = init_b(rng, 1)
    s2, t2 = init_bn(rng, 1)                          # BatchNorm2d(1) after conv2
    conv2 = _prep_conv(w2, s2, b2 * s2 + t2)
    return {"conv1": conv1, "conv2": conv2, "out": conv_plain(rng, c, c, 1)}


def init_calayer(rng, c, red):
    return {"w1": init_w_hwio(rng, 1, 1, c, c // red).reshape(c, c // red),
            "w2": init_w_hwio(rng, 1, 1, c // red, c).reshape(c // red, c)}


def init_rcab(rng, c, k, red):
    return {"conv1": conv_plain(rng, c, c, k, pad=k // 2),
            "conv2": conv_plain(rng, c, c, k, pad=k // 2),
            "ca": init_calayer(rng, c, red)}


def init_rfd(rng, c, k=3, red=4, n_res=2):
    p = {f"rcab{i}": init_rcab(rng, c, k, red) for i in range(n_res)}
    p["final"] = conv_plain(rng, c, c, k, pad=k // 2)
    return p


def init_params(seed=0, channel=32):
    rng = Rng(seed)
    p = {"backbone": {"w4": conv_plain(rng, 3, 64, 1),
                      "w3": conv_plain(rng, 3, 128, 1),
                      "w2": conv_plain(rng, 3, 320, 1),
                      "w1": conv_plain(rng, 3, 512, 1)}}
    p["aspp4"] = init_aspp(rng, 64)
    p["aspp3"] = init_aspp(rng, 128)
    p["aspp2"] = init_aspp(rng, 320)
    p["aspp1"] = init_aspp(rng, 512)
    for i in range(1, 5):
        p[f"mff{i}"] = init_cbam(rng, channel)
    for i in range(1, 4):
        p[f"gate{i}"] = init_gga(rng, channel)
    p["rfd1"] = init_rfd(rng, channel)
    p["rfd2"] = init_rfd(rng, 2 * channel)
    p["rfd3"] = init_rfd(rng, 3 * channel)
    p["gate_conv"] = conv_bn(rng, channel, 1, 1)
    p["gate_conv_1"] = conv_bn(rng, channel, 1, 1)
    p["gate_conv_2"] = conv_bn(rng, 2 * channel, 1, 1)
    p["out"] = conv_bn(rng, 3 * channel, channel, 3, pad=1)
    p["pred"] = conv_bias(rng, channel, 1, 1)
    p["fus"] = init_aspp(rng, 2 * channel)
    p["out_pred"] = conv_bias(rng, channel, 1, 1)
    return p


# ----------------------------------------------------------------------------
# Module forwards (NHWC; tiny glue left to XLA fusion)
# ----------------------------------------------------------------------------
def aspp_forward(p, x):
    B, H, W, _ = x.shape
    outs = [conv2d(x, p["b0"], act="relu")]
    for i in range(3):
        outs.append(conv2d(x, p[f"br{i}"], act="relu"))
    avg = jnp.mean(x, axis=(1, 2))                                   # (B, Cin)
    pooled = jnp.maximum(avg @ p["pool_w"] * p["pool_s"] + p["pool_t"], 0.0)
    pooled = pooled.astype(outs[0].dtype)
    outs.append(jnp.broadcast_to(pooled[:, None, None, :],
                                 (B, H, W, pooled.shape[-1])))       # 1x1 -> HxW bilinear
    y = jnp.concatenate(outs, axis=-1)
    return conv2d(y, p["proj"], act="relu")                          # Dropout: eval identity


def channel_attention(p, x):
    avg = jnp.mean(x, axis=(1, 2))
    mx = jnp.max(x, axis=(1, 2))

    def fc(z):
        return jnp.maximum(z @ p["fc1"], 0.0) @ p["fc2"]

    return jax.nn.sigmoid(fc(avg) + fc(mx)).astype(x.dtype)          # (B, C)


def spatial_attention(p, x):
    z = jnp.concatenate([jnp.mean(x, axis=-1, keepdims=True),
                         jnp.max(x, axis=-1, keepdims=True)], axis=-1)
    return conv2d(z, p["sa"], act="sigmoid")                         # (B, H, W, 1)


def mff_forward(p, img, depth):
    x = img + depth + img * depth
    x = x * channel_attention(p, x)[:, None, None, :]                # CBAM channel gate
    return x * spatial_attention(p, x)                               # CBAM spatial gate


def gga_forward(p, in_feat, gate_feat):
    x = jnp.concatenate([in_feat, gate_feat.astype(in_feat.dtype)], axis=-1)
    h = conv2d(x, p["conv1"], act="relu")                            # BN0 folded in
    att = conv2d(h, p["conv2"], act="sigmoid")                       # BN2 folded in
    return conv2d(in_feat * (att + 1.0), p["out"])


def calayer_forward(p, x):
    y = jnp.mean(x, axis=(1, 2))
    y = jax.nn.sigmoid(jnp.maximum(y @ p["w1"], 0.0) @ p["w2"])
    return x * y[:, None, None, :].astype(x.dtype)


def rcab_forward(p, x):
    r = conv2d(x, p["conv1"], act="prelu", alpha=PRELU_ALPHA)
    r = conv2d(r, p["conv2"])
    r = calayer_forward(p["ca"], r)
    return r + x


def rfd_forward(p, x):
    r = x
    for i in range(2):
        r = rcab_forward(p[f"rcab{i}"], r)
    r = conv2d(r, p["final"])
    return r + x


def backbone_forward(p, x):
    # TODO(synk): synthetic stand-in for pvt_v2_b2 (external module + .pth ckpt).
    B, H, W, _ = x.shape
    feats = []
    for name, s in (("w4", 4), ("w3", 8), ("w2", 16), ("w1", 32)):
        xs = bilinear_resize(x, H // s, W // s, align_corners=False)
        feats.append(conv2d(xs, p[name], act="relu"))
    return feats  # [64@H/4, 128@H/8, 320@H/16, 512@H/32]


@functools.partial(jax.jit, static_argnames=("iteration",))
def risnet_forward(p, x, iteration=3):
    x = jnp.transpose(x, (0, 2, 3, 1))                               # NCHW -> NHWC once
    x4, x3, x2, x1 = backbone_forward(p["backbone"], x)
    x4 = aspp_forward(p["aspp4"], x4)
    x3 = aspp_forward(p["aspp3"], x3)
    x2 = aspp_forward(p["aspp2"], x2)
    x1 = aspp_forward(p["aspp1"], x1)
    x4_img, x4_depth = jnp.split(x4, 2, axis=0)
    x3_img, x3_depth = jnp.split(x3, 2, axis=0)
    x2_img, x2_depth = jnp.split(x2, 2, axis=0)
    x1_img, x1_depth = jnp.split(x1, 2, axis=0)

    stage_pred = []
    coarse_pred = None
    for it in range(iteration):
        x1c = mff_forward(p["mff1"], x1_img, x1_depth)
        if coarse_pred is not None:
            cp = conv2d(coarse_pred, p["gate_conv"])                 # 32->1 1x1 + BN
            cp = bilinear_resize(cp, cp.shape[1] // 4, cp.shape[2] // 4,
                                 align_corners=True)                 # Upsample(0.25)
            x1c = gga_forward(p["gate1"], x1c, cp)
        x2_feed = rfd_forward(p["rfd1"], x1c)

        x2c = mff_forward(p["mff2"], x2_img, x2_depth)
        if it > 0:
            x2c = gga_forward(p["gate2"], x2c,
                              up2(conv2d(x2_feed, p["gate_conv_1"])))
        x3_feed = rfd_forward(p["rfd2"],
                              jnp.concatenate([x2c, up2(x2_feed)], axis=-1))

        x3c = mff_forward(p["mff3"], x3_img, x3_depth)
        if it > 0:
            x3c = gga_forward(p["gate3"], x3c,
                              up2(conv2d(x3_feed, p["gate_conv_2"])))
        x4_feed = rfd_forward(p["rfd3"],
                              jnp.concatenate([x3c, up2(x3_feed)], axis=-1))

        coarse_pred = conv2d(x4_feed, p["out"])                      # 96->32 3x3 + BN
        out_map = conv2d(coarse_pred, p["pred"], out_dtype=jnp.float32)  # 32->1 + bias
        stage_pred.append(bilinear_resize(out_map, out_map.shape[1] * 8,
                                          out_map.shape[2] * 8,
                                          align_corners=False))

    x4c = mff_forward(p["mff4"], x4_img, x4_depth)
    x4_out = bilinear_resize(x4c, x4c.shape[1] // 2, x4c.shape[2] // 2,
                             align_corners=True)                     # Upsample(0.5)
    x_in = jnp.concatenate([coarse_pred, x4_out], axis=-1)
    refined = aspp_forward(p["fus"], x_in)
    pred2 = conv2d(refined, p["out_pred"], out_dtype=jnp.float32)
    final_pred = bilinear_resize(pred2, pred2.shape[1] * 8, pred2.shape[2] * 8,
                                 align_corners=False)

    to_nchw = lambda t: jnp.transpose(t, (0, 3, 1, 2))
    return [to_nchw(sp) for sp in stage_pred], to_nchw(final_pred)


# ----------------------------------------------------------------------------
# Verification helpers + main
# ----------------------------------------------------------------------------
def _verify_conv():
    """Check the Pallas im2col conv path against lax.conv (bf16 in, f32 acc)."""
    rng = Rng(123)
    x = jax.random.normal(rng.next(), (2, 8, 8, 16), jnp.float32)
    w = init_w_hwio(rng, 3, 3, 16, 24)
    got = conv2d(x, _prep_conv(w, pad=2, dil=2), out_dtype=jnp.float32)
    ref = jax.lax.conv_general_dilated(
        x.astype(jnp.bfloat16), w.astype(jnp.bfloat16),
        window_strides=(1, 1), padding=((2, 2), (2, 2)),
        rhs_dilation=(2, 2), dimension_numbers=("NHWC", "HWIO", "NHWC"),
        preferred_element_type=jnp.float32)
    np.testing.assert_allclose(np.asarray(got), np.asarray(ref), atol=2e-2, rtol=0)


def _verify_matmul_multistep():
    """Exercise the K-tiled multi-reduction-step kernel path."""
    rng = Rng(7)
    a = jax.random.normal(rng.next(), (64, 512), jnp.float32)
    w = init_w_hwio(rng, 1, 1, 512, 64)
    layer = _prep_conv(w)
    got = pallas_matmul(a, layer["wm"], layer["scale"], layer["shift"],
                        act="none", out_dtype=jnp.float32, tk_cap=128)[:, :64]
    ref = jnp.dot(a.astype(jnp.bfloat16), w.reshape(512, 64).astype(jnp.bfloat16),
                  preferred_element_type=jnp.float32)
    np.testing.assert_allclose(np.asarray(got), np.asarray(ref), atol=2e-2, rtol=0)


if __name__ == "__main__":
    key = jax.random.PRNGKey(0)
    # batch=2 (chunked internally into img/depth halves), 3-channel 64x64 input
    x = jax.random.normal(key, (2, 3, 64, 64), jnp.float32)
    params = init_params(seed=0)

    _verify_conv()
    _verify_matmul_multistep()

    stage_pred, final_pred = risnet_forward(params, x, iteration=3)

    for sp in stage_pred:
        jax.block_until_ready(sp)
    jax.block_until_ready(final_pred)

    assert len(stage_pred) == 3
    assert all(sp.shape == (1, 1, 64, 64) for sp in stage_pred)
    assert final_pred.shape == (1, 1, 64, 64)
    assert bool(jnp.all(jnp.isfinite(final_pred)))

    print("KERNEL_OK")
</pallas_src>

<mosaic_0001>
module attributes {stable_mosaic.version = 11 : i64} {
  func.func @_mm_kernel_single(%arg0: i32, %arg1: memref<128x144xbf16, #tpu.memory_space<vmem>>, %arg2: memref<144x128xbf16, #tpu.memory_space<vmem>>, %arg3: memref<1x128xf32, #tpu.memory_space<vmem>>, %arg4: memref<1x128xf32, #tpu.memory_space<vmem>>, %arg5: memref<128x128xf32, #tpu.memory_space<vmem>>) attributes {dimension_semantics = [#tpu.dimension_semantics<parallel>], iteration_bounds = array<i64: 1>, scalar_prefetch = 0 : i64, scratch_operands = 0 : i64, tpu.core_type = #tpu.core_type<tc>, window_params = [{transform_indices = @transform_0, window_bounds = array<i64: 128, 144>}, {pipeline_mode = #tpu.pipeline_mode<synchronous>, transform_indices = @transform_1, window_bounds = array<i64: 144, 128>}, {pipeline_mode = #tpu.pipeline_mode<synchronous>, transform_indices = @transform_2, window_bounds = array<i64: 1, 128>}, {pipeline_mode = #tpu.pipeline_mode<synchronous>, transform_indices = @transform_3, window_bounds = array<i64: 1, 128>}, {transform_indices = @transform_4, window_bounds = array<i64: 128, 128>}]} {
    %c0 = arith.constant 0 : index
    %c0_0 = arith.constant 0 : index
    %0 = vector.load %arg1[%c0, %c0_0] : memref<128x144xbf16, #tpu.memory_space<vmem>>, vector<128x144xbf16>
    %c0_1 = arith.constant 0 : index
    %c0_2 = arith.constant 0 : index
    %1 = vector.load %arg2[%c0_1, %c0_2] : memref<144x128xbf16, #tpu.memory_space<vmem>>, vector<144x128xbf16>
    %cst = arith.constant dense<0.000000e+00> : vector<128x128xf32>
    %2 = tpu.matmul %0, %1, %cst {dimension_numbers = #tpu.dot_dimension_numbers<[1], [0], [0], [1], [0, 0, 1, 1], [], []>} : vector<128x144xbf16>, vector<144x128xbf16>, vector<128x128xf32> -> vector<128x128xf32>
    %c0_3 = arith.constant 0 : index
    %c0_4 = arith.constant 0 : index
    %3 = vector.load %arg3[%c0_3, %c0_4] : memref<1x128xf32, #tpu.memory_space<vmem>>, vector<1x128xf32>
    %4 = vector.broadcast %3 : vector<1x128xf32> to vector<128x128xf32>
    %5 = arith.mulf %2, %4 : vector<128x128xf32>
    %c0_5 = arith.constant 0 : index
    %c0_6 = arith.constant 0 : index
    %6 = vector.load %arg4[%c0_5, %c0_6] : memref<1x128xf32, #tpu.memory_space<vmem>>, vector<1x128xf32>
    %7 = vector.broadcast %6 : vector<1x128xf32> to vector<128x128xf32>
    %8 = arith.addf %5, %7 : vector<128x128xf32>
    %c0_7 = arith.constant 0 : index
    %c0_8 = arith.constant 0 : index
    %9 = vector.load %arg5[%c0_7, %c0_8] : memref<128x128xf32, #tpu.memory_space<vmem>>, vector<128x128xf32>
    tpu.vector_store %arg5[%c0_7, %c0_8], %8 {strides = array<i32>} : memref<128x128xf32, #tpu.memory_space<vmem>>, vector<128x128xf32>,
    return
  }
  func.func @transform_0(%arg0: i32) -> (i32, i32) {
    %c0_i32 = arith.constant 0 : i32
    %c0_i32_0 = arith.constant 0 : i32
    return %arg0, %c0_i32 : i32, i32
  }
  func.func @transform_1(%arg0: i32) -> (i32, i32) {
    %c0_i32 = arith.constant 0 : i32
    %c0_i32_0 = arith.constant 0 : i32
    %c0_i32_1 = arith.constant 0 : i32
    return %c0_i32, %c0_i32_0 : i32, i32
  }
  func.func @transform_2(%arg0: i32) -> (i32, i32) {
    %c0_i32 = arith.constant 0 : i32
    %c0_i32_0 = arith.constant 0 : i32
    %c0_i32_1 = arith.constant 0 : i32
    return %c0_i32, %c0_i32_0 : i32, i32
  }
  func.func @transform_3(%arg0: i32) -> (i32, i32) {
    %c0_i32 = arith.constant 0 : i32
    %c0_i32_0 = arith.constant 0 : i32
    %c0_i32_1 = arith.constant 0 : i32
    return %c0_i32, %c0_i32_0 : i32, i32
  }
  func.func @transform_4(%arg0: i32) -> (i32, i32) {
    %c0_i32 = arith.constant 0 : i32
    %c0_i32_0 = arith.constant 0 : i32
    return %arg0, %c0_i32 : i32, i32
  }
}

</mosaic_0001>

<llo_original>
// kernel: pallas_matmul.1
$region0: #{pallas_matmul.1}
  #allocation0 [shape = 'u32[]', space=smem, size = 0x4, offset = 0x4, fixed_abs, tag = 'smem constant byte address 0x4 - core index']
  #allocation1 [shape = 'u32[144,128]{1,0:T(1,128)}', space=vmem, size = 0x12000, scoped, tag = 'internal scratch']
  %s0 = inlined_call_operand.vmem [shape: bf16[128,144], index: 0, kind: input, shape index: {}]
  %s1 = inlined_call_operand.vmem [shape: bf16[144,128], index: 1, kind: input, shape index: {}]
  %s2 = inlined_call_operand.vmem [shape: f32[1,128], index: 2, kind: input, shape index: {}]
  %s3 = inlined_call_operand.vmem [shape: f32[1,128], index: 3, kind: input, shape index: {}]
  %s4 = inlined_call_operand.hbm [shape: f32[128,128], index: 4, kind: output, shape index: {}]
  %s5 = sld [smem:[#allocation0]]
  $region26: #{pallas_matmul.1} parent=0
    _
  %s7 = ssub.s32 1, %s5
  %s8 = scalar_select 0, %s7, %s5
  $region1: #{pallas_matmul.1} parent=0
    #allocation2 [shape = 'u8[65536]{0}', space=vmem, size = 0x10000, scoped, tag = 'output window, operand 0, single buffered']
    #allocation3 [shape = 's32[1]{0}', space=sflag, size = 0x4, scoped, tag = 'scoped memory for pallas_matmul.1']
    %9 = vsyncpa [#allocation3], 0
    // Predicated region
    $region2: #{pallas_matmul.1} parent=1 // pred_check
      _
    $region3: #{pallas_matmul.1} parent=1 // pred_check_branch
      %11 = sbr.rel (0) target = $region5
    $region4: #{pallas_matmul.1} parent=1 // pred_region
      _
    $region5: #{pallas_matmul.1} parent=1 // pred_fallthru
      _
    // Predicated region
    $region6: #{pallas_matmul.1} parent=1 // pred_check
      _
    $region7: #{pallas_matmul.1} parent=1 // pred_check_branch
      %13 = sbr.rel (0) target = $region9
    $region8: #{pallas_matmul.1} parent=1 // pred_region
      _
    $region9: #{pallas_matmul.1} parent=1 // pred_fallthru
      _
    // Predicated region
    $region10: #{pallas_matmul.1} parent=1 // pred_check
      _
    $region11: #{pallas_matmul.1} parent=1 // pred_check_branch
      %15 = sbr.rel (0) target = $region13
    $region12: #{pallas_matmul.1} parent=1 // pred_region
      _
    $region13: #{pallas_matmul.1} parent=1 // pred_fallthru
      _
    // Predicated region
    $region14: #{pallas_matmul.1} parent=1 // pred_check
      _
    $region15: #{pallas_matmul.1} parent=1 // pred_check_branch
      %17 = sbr.rel (0) target = $region17
    $region16: #{pallas_matmul.1} parent=1 // pred_region
      _
    $region17: #{pallas_matmul.1} parent=1 // pred_fallthru
      _
    %v19 = vld [vmem:[%s0] sm:$0xff]
    %v20 = vld [vmem:[%s0 + $0x8] sm:$0xff]
    %v21 = vld [vmem:[%s0 + $0x10] sm:$0xff]
    %v22 = vld [vmem:[%s0 + $0x18] sm:$0xff]
    %v23 = vld [vmem:[%s0 + $0x20] sm:$0xff]
    %v24 = vld [vmem:[%s0 + $0x28] sm:$0xff]
    %v25 = vld [vmem:[%s0 + $0x30] sm:$0xff]
    %v26 = vld [vmem:[%s0 + $0x38] sm:$0xff]
    %v27 = vld [vmem:[%s0 + $0x40] sm:$0xff]
    %v28 = vld [vmem:[%s0 + $0x48] sm:$0xff]
    %v29 = vld [vmem:[%s0 + $0x50] sm:$0xff]
    %v30 = vld [vmem:[%s0 + $0x58] sm:$0xff]
    %v31 = vld [vmem:[%s0 + $0x60] sm:$0xff]
    %v32 = vld [vmem:[%s0 + $0x68] sm:$0xff]
    %v33 = vld [vmem:[%s0 + $0x70] sm:$0xff]
    %v34 = vld [vmem:[%s0 + $0x78] sm:$0xff]
    %v35 = vld [vmem:[%s1] sm:$0xf]
    %v36 = vld [vmem:[%s1 + $0x4] sm:$0xf]
    %v37 = vld [vmem:[%s1 + $0x8] sm:$0xf]
    %v38 = vld [vmem:[%s1 + $0xc] sm:$0xf]
    %v39 = vld [vmem:[%s1 + $0x10] sm:$0xf]
    %v40 = vld [vmem:[%s1 + $0x14] sm:$0xf]
    %v41 = vld [vmem:[%s1 + $0x18] sm:$0xf]
    %v42 = vld [vmem:[%s1 + $0x1c] sm:$0xf]
    %v43 = vld [vmem:[%s1 + $0x20] sm:$0xf]
    %v44 = vld [vmem:[%s1 + $0x24] sm:$0xf]
    %v45 = vld [vmem:[%s1 + $0x28] sm:$0xf]
    %v46 = vld [vmem:[%s1 + $0x2c] sm:$0xf]
    %v47 = vld [vmem:[%s1 + $0x30] sm:$0xf]
    %v48 = vld [vmem:[%s1 + $0x34] sm:$0xf]
    %v49 = vld [vmem:[%s1 + $0x38] sm:$0xf]
    %v50 = vld [vmem:[%s1 + $0x3c] sm:$0xf]
    %v51 = vld [vmem:[%s1 + $0x40] sm:$0xf]
    %v52 = vld [vmem:[%s1 + $0x44] sm:$0xf]
    %v69 = vunpack.c.l.b16 %v19
    %v70 = vunpack.c.h.b16 %v19
    %v71 = vunpack.c.l.b16 %v20
    %v72 = vunpack.c.h.b16 %v20
    %v73 = vunpack.c.l.b16 %v21
    %v74 = vunpack.c.h.b16 %v21
    %v75 = vunpack.c.l.b16 %v22
    %v76 = vunpack.c.h.b16 %v22
    %v77 = vunpack.c.l.b16 %v23
    %v78 = vunpack.c.h.b16 %v23
    %v79 = vunpack.c.l.b16 %v24
    %v80 = vunpack.c.h.b16 %v24
    %v81 = vunpack.c.l.b16 %v25
    %v82 = vunpack.c.h.b16 %v25
    %v83 = vunpack.c.l.b16 %v26
    %v84 = vunpack.c.h.b16 %v26
    %v85 = vunpack.c.l.b16 %v27
    %v86 = vunpack.c.h.b16 %v27
    %v87 = vunpack.c.l.b16 %v28
    %v88 = vunpack.c.h.b16 %v28
    %v89 = vunpack.c.l.b16 %v29
    %v90 = vunpack.c.h.b16 %v29
    %v91 = vunpack.c.l.b16 %v30
    %v92 = vunpack.c.h.b16 %v30
    %v93 = vunpack.c.l.b16 %v31
    %v94 = vunpack.c.h.b16 %v31
    %v95 = vunpack.c.l.b16 %v32
    %v96 = vunpack.c.h.b16 %v32
    %v97 = vunpack.c.l.b16 %v33
    %v98 = vunpack.c.h.b16 %v33
    %v99 = vunpack.c.l.b16 %v34
    %v100 = vunpack.c.h.b16 %v34
    %v101 = vpack.c.b16 %v71, %v69
    %v102 = vpack.c.b16 %v72, %v70
    %v103 = vpack.c.b16 %v75, %v73
    %v104 = vpack.c.b16 %v76, %v74
    %v105 = vpack.c.b16 %v79, %v77
    %v106 = vpack.c.b16 %v80, %v78
    %v107 = vpack.c.b16 %v83, %v81
    %v108 = vpack.c.b16 %v84, %v82
    %v109 = vpack.c.b16 %v87, %v85
    %v110 = vpack.c.b16 %v88, %v86
    %v111 = vpack.c.b16 %v91, %v89
    %v112 = vpack.c.b16 %v92, %v90
    %v113 = vpack.c.b16 %v95, %v93
    %v114 = vpack.c.b16 %v96, %v94
    %v115 = vpack.c.b16 %v99, %v97
    %v116 = vpack.c.b16 %v100, %v98
    %v143 = vunpack.c.l.b16 %v35
    %v144 = vunpack.c.l.b16 %v36
    %v145 = vunpack.c.l.b16 %v37
    %v146 = vunpack.c.l.b16 %v38
    %v147 = vunpack.c.l.b16 %v39
    %v148 = vunpack.c.l.b16 %v40
    %v149 = vunpack.c.l.b16 %v41
    %v150 = vunpack.c.l.b16 %v42
    %v151 = vunpack.c.l.b16 %v43
    %v152 = vunpack.c.l.b16 %v44
    %v153 = vunpack.c.l.b16 %v45
    %v154 = vunpack.c.l.b16 %v46
    %v155 = vunpack.c.l.b16 %v47
    %v156 = vunpack.c.l.b16 %v48
    %v157 = vunpack.c.l.b16 %v49
    %v158 = vunpack.c.l.b16 %v50
    %v159 = vunpack.c.l.b16 %v51
    %v160 = vunpack.c.l.b16 %v52
    %v161 = vpack.c.b16 %v144, %v143
    %v162 = vpack.c.b16 %v146, %v145
    %v163 = vpack.c.b16 %v148, %v147
    %v164 = vpack.c.b16 %v150, %v149
    %v165 = vpack.c.b16 %v152, %v151
    %v166 = vpack.c.b16 %v154, %v153
    %v167 = vpack.c.b16 %v156, %v155
    %v168 = vpack.c.b16 %v158, %v157
    %v169 = vpack.c.b16 %v160, %v159
    %vm179 = vcmask 130048
    %v181 = vsel %vm179, %v102, 0
    %v184 = vsel %vm179, %v104, 0
    %v187 = vsel %vm179, %v106, 0
    %v190 = vsel %vm179, %v108, 0
    %v193 = vsel %vm179, %v110, 0
    %v196 = vsel %vm179, %v112, 0
    %v199 = vsel %vm179, %v114, 0
    %v202 = vsel %vm179, %v116, 0
    %204 = vmatprep.subr.bf16.mxu0 0
    %205 = vmatpush1.bf16.msra.mxu0 %v168
    %206 = vmatprep.subr.bf16.mxu0 0
    %207 = vmatpush1.bf16.msra.mxu0 %v167
    %208 = vmatprep.subr.bf16.mxu0 0
    %209 = vmatpush1.bf16.msra.mxu0 %v166
    %210 = vmatprep.subr.bf16.mxu0 0
    %211 = vmatpush1.bf16.msra.mxu0 %v165
    %212 = vmatprep.subr.bf16.mxu0 0
    %213 = vmatpush1.bf16.msra.mxu0 %v164
    %214 = vmatprep.subr.bf16.mxu0 0
    %215 = vmatpush1.bf16.msra.mxu0 %v163
    %216 = vmatprep.subr.bf16.mxu0 0
    %217 = vmatpush1.bf16.msra.mxu0 %v162
    %218 = vmatprep.subr.bf16.mxu0 0
    %219 = vmatpush1.bf16.msra.mxu0 %v161
    %220 = vmatprep.subr.bf16.mxu0 0
    %221 = vmatpush2.bf16.msra.mxu0 0
    %222 = vmatprep.subr.bf16.mxu0 0
    %223 = vmatpush2.bf16.msra.mxu0 0
    %224 = vmatprep.subr.bf16.mxu0 0
    %225 = vmatpush2.bf16.msra.mxu0 0
    %226 = vmatprep.subr.bf16.mxu0 0
    %227 = vmatpush2.bf16.msra.mxu0 0
    %228 = vmatprep.subr.bf16.mxu0 0
    %229 = vmatpush2.bf16.msra.mxu0 0
    %230 = vmatprep.subr.bf16.mxu0 0
    %231 = vmatpush2.bf16.msra.mxu0 0
    %232 = vmatprep.subr.bf16.mxu0 0
    %233 = vmatpush2.bf16.msra.mxu0 0
    %234 = vmatprep.subr.bf16.mxu0 0
    %235 = vmatpush2.bf16.msra.mxu0 %v169
    %236 = vmatprep.mubr.bf16.mxu0 %v181
    %237 = vmatmul.mubr.bf16.gmra.mxu0 %v101
    %v238 = vpop.f32.mrf.mxu0
    %v239 = vadd.f32 0.0, %v238
    %v240 = vpop.f32.mrf.mxu0
    %v241 = vpop.f32.mrf.mxu0
    %v242 = vadd.f32 0.0, %v241
    %v243 = vpop.f32.mrf.mxu0
    %244 = vmatprep.mubr.bf16.mxu0 %v184
    %245 = vmatmul.mubr.bf16.gmra.mxu0 %v103
    %v246 = vpop.f32.mrf.mxu0
    %v247 = vadd.f32 0.0, %v246
    %v248 = vpop.f32.mrf.mxu0
    %v249 = vpop.f32.mrf.mxu0
    %v250 = vadd.f32 0.0, %v249
    %v251 = vpop.f32.mrf.mxu0
    %252 = vmatprep.mubr.bf16.mxu0 %v187
    %253 = vmatmul.mubr.bf16.gmra.mxu0 %v105
    %v254 = vpop.f32.mrf.mxu0
    %v255 = vadd.f32 0.0, %v254
    %v256 = vpop.f32.mrf.mxu0
    %v257 = vpop.f32.mrf.mxu0
    %v258 = vadd.f32 0.0, %v257
    %v259 = vpop.f32.mrf.mxu0
    %260 = vmatprep.mubr.bf16.mxu0 %v190
    %261 = vmatmul.mubr.bf16.gmra.mxu0 %v107
    %v262 = vpop.f32.mrf.mxu0
    %v263 = vadd.f32 0.0, %v262
    %v264 = vpop.f32.mrf.mxu0
    %v265 = vpop.f32.mrf.mxu0
    %v266 = vadd.f32 0.0, %v265
    %v267 = vpop.f32.mrf.mxu0
    %268 = vmatprep.mubr.bf16.mxu0 %v193
    %269 = vmatmul.mubr.bf16.gmra.mxu0 %v109
    %v270 = vpop.f32.mrf.mxu0
    %v271 = vadd.f32 0.0, %v270
    %v272 = vpop.f32.mrf.mxu0
    %v273 = vpop.f32.mrf.mxu0
    %v274 = vadd.f32 0.0, %v273
    %v275 = vpop.f32.mrf.mxu0
    %276 = vmatprep.mubr.bf16.mxu0 %v196
    %277 = vmatmul.mubr.bf16.gmra.mxu0 %v111
    %v278 = vpop.f32.mrf.mxu0
    %v279 = vadd.f32 0.0, %v278
    %v280 = vpop.f32.mrf.mxu0
    %v281 = vpop.f32.mrf.mxu0
    %v282 = vadd.f32 0.0, %v281
    %v283 = vpop.f32.mrf.mxu0
    %284 = vmatprep.mubr.bf16.mxu0 %v199
    %285 = vmatmul.mubr.bf16.gmra.mxu0 %v113
    %v286 = vpop.f32.mrf.mxu0
    %v287 = vadd.f32 0.0, %v286
    %v288 = vpop.f32.mrf.mxu0
    %v289 = vpop.f32.mrf.mxu0
    %v290 = vadd.f32 0.0, %v289
    %v291 = vpop.f32.mrf.mxu0
    %292 = vmatprep.mubr.bf16.mxu0 %v202
    %293 = vmatmul.mubr.bf16.gmra.mxu0 %v115
    %v294 = vpop.f32.mrf.mxu0
    %v295 = vadd.f32 0.0, %v294
    %v296 = vpop.f32.mrf.mxu0
    %v297 = vpop.f32.mrf.mxu0
    %v298 = vadd.f32 0.0, %v297
    %v299 = vpop.f32.mrf.mxu0
    %300 = vdwg.mxu0
    %v301 = vld [vmem:[%s2] sm:$0x1]
    %v303 = vlaneseq
    %v304 = vshrl.u32 %v303, 7
    %v305 = vsub.s32 0, %v304
    %v306 = vrot.slane %v301, %v305
    %v308 = vmul.f32 %v239, %v306
    %v309 = vmul.f32 %v242, %v306
    %v310 = vmul.f32 %v247, %v306
    %v311 = vmul.f32 %v250, %v306
    %v312 = vmul.f32 %v255, %v306
    %v313 = vmul.f32 %v258, %v306
    %v314 = vmul.f32 %v263, %v306
    %v315 = vmul.f32 %v266, %v306
    %v316 = vmul.f32 %v271, %v306
    %v317 = vmul.f32 %v274, %v306
    %v318 = vmul.f32 %v279, %v306
    %v319 = vmul.f32 %v282, %v306
    %v320 = vmul.f32 %v287, %v306
    %v321 = vmul.f32 %v290, %v306
    %v322 = vmul.f32 %v295, %v306
    %v323 = vmul.f32 %v298, %v306
    %v324 = vld [vmem:[%s3] sm:$0x1]
    %v326 = vlaneseq
    %v327 = vshrl.u32 %v326, 7
    %v328 = vsub.s32 0, %v327
    %v329 = vrot.slane %v324, %v328
    %v331 = vadd.f32 %v308, %v329
    %v332 = vadd.f32 %v309, %v329
    %v333 = vadd.f32 %v310, %v329
    %v334 = vadd.f32 %v311, %v329
    %v335 = vadd.f32 %v312, %v329
    %v336 = vadd.f32 %v313, %v329
    %v337 = vadd.f32 %v314, %v329
    %v338 = vadd.f32 %v315, %v329
    %v339 = vadd.f32 %v316, %v329
    %v340 = vadd.f32 %v317, %v329
    %v341 = vadd.f32 %v318, %v329
    %v342 = vadd.f32 %v319, %v329
    %v343 = vadd.f32 %v320, %v329
    %v344 = vadd.f32 %v321, %v329
    %v345 = vadd.f32 %v322, %v329
    %v346 = vadd.f32 %v323, %v329
    %347 = vst [vmem:[#allocation2] sm:$0xff] %v331
    %348 = vst [vmem:[#allocation2 + $0x8] sm:$0xff] %v332
    %349 = vst [vmem:[#allocation2 + $0x10] sm:$0xff] %v333
    %350 = vst [vmem:[#allocation2 + $0x18] sm:$0xff] %v334
    %351 = vst [vmem:[#allocation2 + $0x20] sm:$0xff] %v335
    %352 = vst [vmem:[#allocation2 + $0x28] sm:$0xff] %v336
    %353 = vst [vmem:[#allocation2 + $0x30] sm:$0xff] %v337
    %354 = vst [vmem:[#allocation2 + $0x38] sm:$0xff] %v338
    %355 = vst [vmem:[#allocation2 + $0x40] sm:$0xff] %v339
    %356 = vst [vmem:[#allocation2 + $0x48] sm:$0xff] %v340
    %357 = vst [vmem:[#allocation2 + $0x50] sm:$0xff] %v341
    %358 = vst [vmem:[#allocation2 + $0x58] sm:$0xff] %v342
    %359 = vst [vmem:[#allocation2 + $0x60] sm:$0xff] %v343
    %360 = vst [vmem:[#allocation2 + $0x68] sm:$0xff] %v344
    %361 = vst [vmem:[#allocation2 + $0x70] sm:$0xff] %v345
    %362 = vst [vmem:[#allocation2 + $0x78] sm:$0xff] %v346
    // Predicated region
    $region18: #{pallas_matmul.1} parent=1 // pred_check
      _
    $region19: #{pallas_matmul.1} parent=1 // pred_check_branch
      %364 = sbr.rel (0) target = $region21
    $region20: #{pallas_matmul.1} parent=1 // pred_region
      %s366 = ssub.s32 2048, 2048
      %367 = vsyncadd [#allocation3], %s366
      %s368 = sshll.u32 [#allocation2], 4
      %s369 = int_to_ptr.vmem [resolvable:$true] %s368
      %374 = dma.vmem_to_hbm [thread:$0]  %s369, 2048, %s4, [#allocation3], 128, 128, 8
    $region21: #{pallas_matmul.1} parent=1 // pred_fallthru
      _
    // Predicated region
    $region22: #{pallas_matmul.1} parent=1 // pred_check
      _
    $region23: #{pallas_matmul.1} parent=1 // pred_check_branch
      %376 = sbr.rel (0) target = $region25
    $region24: #{pallas_matmul.1} parent=1 // pred_region
      %377 = dma.done [#allocation3], 2048
    $region25: #{pallas_matmul.1} parent=1 // pred_fallthru
      _
    %378 = vsyncpa [#allocation3], 1

</llo_original>
